<compile_context>
chip_gen: v6e
topology: v6e:2x2x1
jax: 0.10.0
libtpu: 0.0.40
codegen_flags: <defaults>
</compile_context>

<pallas_src>
import jax
import jax.numpy as jnp
from jax.experimental import pallas as pl
from jax.experimental.pallas import tpu as pltpu

HIDDEN = 100          # logical hidden size: Linear(D_in,100) / LayerNorm(100)
LN_EPS = 1e-5         # PyTorch LayerNorm default eps
LRELU_SLOPE = 0.01    # PyTorch LeakyReLU default negative_slope
MAX_TK = 16384        # max reduction-tile width (bf16: safe on v5e/v6e/v7x)
NUM_SPLITS = 2        # leading "parallel" grid axis -> both TensorCores on v7x


def _plan(d_in: int):
    """Split the flattened-feature axis into an even number of 128-aligned chunks.

    Returns (tk, n_steps, d_pad) with n_steps a multiple of NUM_SPLITS,
    tk <= MAX_TK, tk % 128 == 0 and d_pad = n_steps * tk >= d_in."""
    n_steps = max(NUM_SPLITS, NUM_SPLITS * pl.cdiv(d_in, NUM_SPLITS * MAX_TK))
    tk = pl.cdiv(pl.cdiv(d_in, n_steps), 128) * 128
    return tk, n_steps, n_steps * tk


def _matvec_kernel(x_ref, w1_ref, part_ref, acc_ref):
    """Streaming (1, tk)@(tk, 100) partial matvec; one partial row per grid slot."""
    k = pl.program_id(1)

    @pl.when(k == 0)
    def _():
        acc_ref[...] = jnp.zeros_like(acc_ref)

    # Hot path: bf16 x bf16 -> f32 accumulation on the MXU.
    acc_ref[...] += jnp.dot(x_ref[...], w1_ref[...],
                            preferred_element_type=jnp.float32)

    @pl.when(k == pl.num_programs(1) - 1)
    def _():
        part_ref[...] = acc_ref[...].reshape(part_ref.shape)


def _epilogue_kernel(part_ref, b1_ref, w2_ref, b2_ref, g_ref, be_ref, o_ref):
    """bias + LeakyReLU + LayerNorm(100) + Linear(100,1) + Sigmoid (runs once)."""
    h = jnp.sum(part_ref[...], axis=0) + b1_ref[...]          # (1, HIDDEN)
    h = jnp.where(h > 0, h, LRELU_SLOPE * h)                  # LeakyReLU(0.01)
    mean = jnp.mean(h, axis=-1, keepdims=True)                # biased stats
    diff = h - mean
    var = jnp.mean(diff * diff, axis=-1, keepdims=True)
    hn = diff * jax.lax.rsqrt(var + LN_EPS)
    hn = hn * g_ref[...] + be_ref[...]
    logit = jnp.sum(hn * w2_ref[...], axis=-1, keepdims=True) + b2_ref[...]
    o_ref[...] = jax.nn.sigmoid(logit)                        # (1, 1)


@jax.jit
def discriminator_forward(x, w1_t, b1, w2_row, b2, gamma, beta):
    """x: any shape with prod(shape) == D_in; params from init_params."""
    d_in = x.size                                   # static under jit
    tk, n_steps, d_pad = _plan(d_in)
    assert w1_t.shape == (d_pad, HIDDEN), (w1_t.shape, d_pad)
    steps_per_split = n_steps // NUM_SPLITS

    xf = jnp.reshape(x, (1, d_in)).astype(jnp.float32)        # View(D_in)
    xf = jnp.pad(xf, ((0, 0), (0, d_pad - d_in))).astype(jnp.bfloat16)

    cost = pl.CostEstimate(
        flops=2 * d_pad * HIDDEN,
        transcendentals=0,
        bytes_accessed=d_pad * HIDDEN * 2 + d_pad * 2 + NUM_SPLITS * HIDDEN * 4,
    )

    # Stage 1: HBM-bound streaming matvec, split across NUM_SPLITS parallel slots.
    partial = pl.pallas_call(
        _matvec_kernel,
        out_shape=jax.ShapeDtypeStruct((NUM_SPLITS, 1, HIDDEN), jnp.float32),
        grid_spec=pltpu.PrefetchScalarGridSpec(
            num_scalar_prefetch=0,
            grid=(NUM_SPLITS, steps_per_split),
            in_specs=[
                pl.BlockSpec((1, tk),
                             lambda c, k: (0, c * steps_per_split + k)),
                pl.BlockSpec((tk, HIDDEN),
                             lambda c, k: (c * steps_per_split + k, 0)),
            ],
            out_specs=pl.BlockSpec((1, 1, HIDDEN), lambda c, k: (c, 0, 0)),
            scratch_shapes=[pltpu.VMEM((1, HIDDEN), jnp.float32)],
        ),
        compiler_params=pltpu.CompilerParams(
            dimension_semantics=("parallel", "arbitrary")),
        cost_estimate=cost,
    )(xf, w1_t)

    # Stage 2: tiny fused epilogue on the combined partial sums (runs once).
    out = pl.pallas_call(
        _epilogue_kernel,
        out_shape=jax.ShapeDtypeStruct((1, 1), jnp.float32),
    )(partial, b1, w2_row, b2, gamma, beta)
    return out.reshape((1,))                                  # matches PyTorch (1,)


def init_params(key, d_in):
    """Deterministic synthetic parameters (PyTorch-like uniform init), pre-laid-out
    for the kernel:
      W1^T: (d_pad, 100) bfloat16 with zero rows >= d_in (inert padding)
      b1/gamma/beta: (1, 100) f32;  W2^T as a (1, 100) f32 row;  b2: (1, 1)."""
    _, _, d_pad = _plan(d_in)

    k1, k2, k3, k4 = jax.random.split(key, 4)
    bound1 = float(d_in) ** -0.5
    w1 = jax.random.uniform(k1, (d_in, HIDDEN), jnp.float32, -bound1, bound1)
    b1 = jax.random.uniform(k2, (1, HIDDEN), jnp.float32, -bound1, bound1)
    bound2 = float(HIDDEN) ** -0.5
    w2 = jax.random.uniform(k3, (1, HIDDEN), jnp.float32, -bound2, bound2)
    b2 = jax.random.uniform(k4, (1, 1), jnp.float32, -bound2, bound2)
    gamma = jnp.ones((1, HIDDEN), jnp.float32)                # LayerNorm weight
    beta = jnp.zeros((1, HIDDEN), jnp.float32)                # LayerNorm bias

    w1_p = (jnp.zeros((d_pad, HIDDEN), jnp.float32).at[:d_in].set(w1)
            .astype(jnp.bfloat16))
    return w1_p, b1, w2, b2, gamma, beta


def reference_forward(x, w1_bf16, b1, w2_row, b2, gamma, beta):
    """Pure-JAX reference using the same bf16-rounded W1 / x as the kernel
    (bf16 weight storage is a deliberate bandwidth optimization; vs. a fully
    f32 model expect ~1e-3-level differences)."""
    d_in = x.size
    xf = jnp.reshape(x, (1, d_in)).astype(jnp.bfloat16).astype(jnp.float32)
    w1 = w1_bf16[:d_in].astype(jnp.float32)
    h = xf @ w1 + b1
    h = jnp.where(h > 0, h, LRELU_SLOPE * h)
    mean = jnp.mean(h, axis=-1, keepdims=True)
    var = jnp.mean((h - mean) ** 2, axis=-1, keepdims=True)
    hn = (h - mean) / jnp.sqrt(var + LN_EPS) * gamma + beta
    out = jnp.sum(hn * w2_row, axis=-1, keepdims=True) + b2
    return jax.nn.sigmoid(out).reshape((1,))


if __name__ == "__main__":
    # Small shape consistent with the module: one NCHW image of shape (3, 16, 16),
    # D_in = 3*16*16 = 768 (the real model uses 3*218*178 = 116412).
    C, H, W = 3, 16, 16
    d_in = C * H * W

    key = jax.random.PRNGKey(0)
    kx, kp = jax.random.split(key)
    x = jax.random.normal(kx, (C, H, W), jnp.float32)
    params = init_params(kp, d_in)

    out = jax.block_until_ready(discriminator_forward(x, *params))
    ref = reference_forward(x, *params)

    assert out.shape == (1,), out.shape
    assert bool(jnp.all(jnp.isfinite(out))), out
    assert jnp.allclose(out, ref, atol=1e-3, rtol=1e-3), (out, ref)
    print("KERNEL_OK")
</pallas_src>

<mosaic_0001>
module attributes {stable_mosaic.version = 11 : i64} {
  func.func @_matvec_kernel(%arg0: i32, %arg1: i32, %arg2: memref<1x384xbf16, #tpu.memory_space<vmem>>, %arg3: memref<384x100xbf16, #tpu.memory_space<vmem>>, %arg4: memref<1x1x100xf32, #tpu.memory_space<vmem>>, %arg5: memref<1x100xf32, #tpu.memory_space<vmem>>) attributes {dimension_semantics = [#tpu.dimension_semantics<parallel>, #tpu.dimension_semantics<arbitrary>], iteration_bounds = array<i64: 2, 1>, scalar_prefetch = 0 : i64, scratch_operands = 1 : i64, tpu.core_type = #tpu.core_type<tc>, window_params = [{transform_indices = @transform_0, window_bounds = array<i64: 1, 384>}, {transform_indices = @transform_1, window_bounds = array<i64: 384, 100>}, {transform_indices = @transform_2, window_bounds = array<i64: 1, 1, 100>}]} {
    %c0_i32 = arith.constant 0 : i32
    %0 = arith.cmpi eq, %arg1, %c0_i32 : i32
    %1 = arith.extui %0 : i1 to i32
    %c0_i32_0 = arith.constant 0 : i32
    %2 = arith.cmpi ne, %1, %c0_i32_0 : i32
    scf.if %2 {
      %cst_10 = arith.constant 0.000000e+00 : f32
      %12 = vector.broadcast %cst_10 : f32 to vector<1x100xf32>
      %c0_11 = arith.constant 0 : index
      %c0_12 = arith.constant 0 : index
      %13 = vector.load %arg5[%c0_11, %c0_12] : memref<1x100xf32, #tpu.memory_space<vmem>>, vector<1x100xf32>
      tpu.vector_store %arg5[%c0_11, %c0_12], %12 {strides = array<i32>} : memref<1x100xf32, #tpu.memory_space<vmem>>, vector<1x100xf32>,
    } else {
    }
    %c0 = arith.constant 0 : index
    %c0_1 = arith.constant 0 : index
    %3 = vector.load %arg5[%c0, %c0_1] : memref<1x100xf32, #tpu.memory_space<vmem>>, vector<1x100xf32>
    %c0_2 = arith.constant 0 : index
    %c0_3 = arith.constant 0 : index
    %4 = vector.load %arg2[%c0_2, %c0_3] : memref<1x384xbf16, #tpu.memory_space<vmem>>, vector<1x384xbf16>
    %c0_4 = arith.constant 0 : index
    %c0_5 = arith.constant 0 : index
    %5 = vector.load %arg3[%c0_4, %c0_5] : memref<384x100xbf16, #tpu.memory_space<vmem>>, vector<384x100xbf16>
    %cst = arith.constant dense<0.000000e+00> : vector<1x100xf32>
    %6 = tpu.matmul %4, %5, %cst {dimension_numbers = #tpu.dot_dimension_numbers<[1], [0], [0], [1], [0, 0, 1, 1], [], []>} : vector<1x384xbf16>, vector<384x100xbf16>, vector<1x100xf32> -> vector<1x100xf32>
    %7 = arith.addf %3, %6 : vector<1x100xf32>
    %c0_6 = arith.constant 0 : index
    %c0_7 = arith.constant 0 : index
    %8 = vector.load %arg5[%c0_6, %c0_7] : memref<1x100xf32, #tpu.memory_space<vmem>>, vector<1x100xf32>
    tpu.vector_store %arg5[%c0_6, %c0_7], %7 {strides = array<i32>} : memref<1x100xf32, #tpu.memory_space<vmem>>, vector<1x100xf32>,
    %c0_i32_8 = arith.constant 0 : i32
    %9 = arith.cmpi eq, %arg1, %c0_i32_8 : i32
    %10 = arith.extui %9 : i1 to i32
    %c0_i32_9 = arith.constant 0 : i32
    %11 = arith.cmpi ne, %10, %c0_i32_9 : i32
    scf.if %11 {
      %c0_10 = arith.constant 0 : index
      %c0_11 = arith.constant 0 : index
      %12 = vector.load %arg5[%c0_10, %c0_11] : memref<1x100xf32, #tpu.memory_space<vmem>>, vector<1x100xf32>
      %13 = vector.shape_cast %12 : vector<1x100xf32> to vector<1x1x100xf32>
      %c0_12 = arith.constant 0 : index
      %c0_13 = arith.constant 0 : index
      %c0_14 = arith.constant 0 : index
      %14 = vector.load %arg4[%c0_12, %c0_13, %c0_14] : memref<1x1x100xf32, #tpu.memory_space<vmem>>, vector<1x1x100xf32>
      tpu.vector_store %arg4[%c0_12, %c0_13, %c0_14], %13 {strides = array<i32>} : memref<1x1x100xf32, #tpu.memory_space<vmem>>, vector<1x1x100xf32>,
    } else {
    }
    return
  }
  func.func @transform_0(%arg0: i32, %arg1: i32) -> (i32, i32) {
    %c1_i32 = arith.constant 1 : i32
    %0 = arith.muli %arg0, %c1_i32 : i32
    %1 = arith.addi %0, %arg1 : i32
    %c0_i32 = arith.constant 0 : i32
    %c0_i32_0 = arith.constant 0 : i32
    return %c0_i32, %1 : i32, i32
  }
  func.func @transform_1(%arg0: i32, %arg1: i32) -> (i32, i32) {
    %c1_i32 = arith.constant 1 : i32
    %0 = arith.muli %arg0, %c1_i32 : i32
    %1 = arith.addi %0, %arg1 : i32
    %c0_i32 = arith.constant 0 : i32
    %c0_i32_0 = arith.constant 0 : i32
    return %1, %c0_i32 : i32, i32
  }
  func.func @transform_2(%arg0: i32, %arg1: i32) -> (i32, i32, i32) {
    %c0_i32 = arith.constant 0 : i32
    %c0_i32_0 = arith.constant 0 : i32
    %c0_i32_1 = arith.constant 0 : i32
    return %arg0, %c0_i32, %c0_i32_0 : i32, i32, i32
  }
}

module attributes {stable_mosaic.version = 11 : i64} {
  func.func @_epilogue_kernel(%arg0: memref<2x1x100xf32, #tpu.memory_space<vmem>>, %arg1: memref<1x100xf32, #tpu.memory_space<vmem>>, %arg2: memref<1x100xf32, #tpu.memory_space<vmem>>, %arg3: memref<1x1xf32, #tpu.memory_space<vmem>>, %arg4: memref<1x100xf32, #tpu.memory_space<vmem>>, %arg5: memref<1x100xf32, #tpu.memory_space<vmem>>, %arg6: memref<1x1xf32, #tpu.memory_space<vmem>>) attributes {dimension_semantics = [], scalar_prefetch = 0 : i64, scratch_operands = 0 : i64, tpu.core_type = #tpu.core_type<tc>} {
    %c0 = arith.constant 0 : index
    %c0_0 = arith.constant 0 : index
    %c0_1 = arith.constant 0 : index
    %0 = vector.load %arg0[%c0, %c0_0, %c0_1] : memref<2x1x100xf32, #tpu.memory_space<vmem>>, vector<2x1x100xf32>
    %cst = arith.constant dense<0.000000e+00> : vector<1x100xf32>
    %1 = vector.multi_reduction <add>, %0, %cst [0] : vector<2x1x100xf32> to vector<1x100xf32>
    %c0_2 = arith.constant 0 : index
    %c0_3 = arith.constant 0 : index
    %2 = vector.load %arg1[%c0_2, %c0_3] : memref<1x100xf32, #tpu.memory_space<vmem>>, vector<1x100xf32>
    %3 = arith.addf %1, %2 : vector<1x100xf32>
    %cst_4 = arith.constant 0.000000e+00 : f32
    %4 = vector.broadcast %cst_4 : f32 to vector<1x100xf32>
    %5 = arith.cmpf ogt, %3, %4 : vector<1x100xf32>
    %cst_5 = arith.constant 0.00999999977 : f32
    %6 = vector.broadcast %cst_5 : f32 to vector<1x100xf32>
    %7 = arith.mulf %6, %3 : vector<1x100xf32>
    %8 = arith.select %5, %3, %7 : vector<1x100xi1>, vector<1x100xf32>
    %cst_6 = arith.constant dense<0.000000e+00> : vector<1xf32>
    %9 = vector.multi_reduction <add>, %8, %cst_6 [1] : vector<1x100xf32> to vector<1xf32>
    %10 = vector.shape_cast %9 : vector<1xf32> to vector<1x1xf32>
    %cst_7 = arith.constant 1.000000e+02 : f32
    %11 = vector.broadcast %cst_7 : f32 to vector<1x1xf32>
    %12 = arith.divf %10, %11 : vector<1x1xf32>
    %13 = vector.broadcast %12 : vector<1x1xf32> to vector<1x100xf32>
    %14 = arith.subf %8, %13 : vector<1x100xf32>
    %15 = arith.mulf %14, %14 : vector<1x100xf32>
    %cst_8 = arith.constant dense<0.000000e+00> : vector<1xf32>
    %16 = vector.multi_reduction <add>, %15, %cst_8 [1] : vector<1x100xf32> to vector<1xf32>
    %17 = vector.shape_cast %16 : vector<1xf32> to vector<1x1xf32>
    %cst_9 = arith.constant 1.000000e+02 : f32
    %18 = vector.broadcast %cst_9 : f32 to vector<1x1xf32>
    %19 = arith.divf %17, %18 : vector<1x1xf32>
    %cst_10 = arith.constant 9.99999974E-6 : f32
    %20 = vector.broadcast %cst_10 : f32 to vector<1x1xf32>
    %21 = arith.addf %19, %20 : vector<1x1xf32>
    %22 = math.rsqrt %21 : vector<1x1xf32>
    %23 = vector.broadcast %22 : vector<1x1xf32> to vector<1x100xf32>
    %24 = arith.mulf %14, %23 : vector<1x100xf32>
    %c0_11 = arith.constant 0 : index
    %c0_12 = arith.constant 0 : index
    %25 = vector.load %arg4[%c0_11, %c0_12] : memref<1x100xf32, #tpu.memory_space<vmem>>, vector<1x100xf32>
    %26 = arith.mulf %24, %25 : vector<1x100xf32>
    %c0_13 = arith.constant 0 : index
    %c0_14 = arith.constant 0 : index
    %27 = vector.load %arg5[%c0_13, %c0_14] : memref<1x100xf32, #tpu.memory_space<vmem>>, vector<1x100xf32>
    %28 = arith.addf %26, %27 : vector<1x100xf32>
    %c0_15 = arith.constant 0 : index
    %c0_16 = arith.constant 0 : index
    %29 = vector.load %arg2[%c0_15, %c0_16] : memref<1x100xf32, #tpu.memory_space<vmem>>, vector<1x100xf32>
    %30 = arith.mulf %28, %29 : vector<1x100xf32>
    %cst_17 = arith.constant dense<0.000000e+00> : vector<1xf32>
    %31 = vector.multi_reduction <add>, %30, %cst_17 [1] : vector<1x100xf32> to vector<1xf32>
    %32 = vector.shape_cast %31 : vector<1xf32> to vector<1x1xf32>
    %c0_18 = arith.constant 0 : index
    %c0_19 = arith.constant 0 : index
    %33 = vector.load %arg3[%c0_18, %c0_19] : memref<1x1xf32, #tpu.memory_space<vmem>>, vector<1x1xf32>
    %34 = arith.addf %32, %33 : vector<1x1xf32>
    %35 = arith.negf %34 : vector<1x1xf32>
    %36 = math.exp %35 : vector<1x1xf32>
    %cst_20 = arith.constant 1.000000e+00 : f32
    %37 = vector.broadcast %cst_20 : f32 to vector<1x1xf32>
    %38 = arith.addf %37, %36 : vector<1x1xf32>
    %39 = arith.divf %37, %38 : vector<1x1xf32>
    %c0_21 = arith.constant 0 : index
    %c0_22 = arith.constant 0 : index
    %40 = vector.load %arg6[%c0_21, %c0_22] : memref<1x1xf32, #tpu.memory_space<vmem>>, vector<1x1xf32>
    tpu.vector_store %arg6[%c0_21, %c0_22], %39 {strides = array<i32>} : memref<1x1xf32, #tpu.memory_space<vmem>>, vector<1x1xf32>,
    return
  }
}

</mosaic_0001>

<llo_original>
// kernel: discriminator_forward.3
$region0: #{discriminator_forward.3}
  #allocation0 [shape = 'u32[]', space=smem, size = 0x4, offset = 0x4, fixed_abs, tag = 'smem constant byte address 0x4 - core index']
  #allocation1 [shape = 'u32[144,128]{1,0:T(1,128)}', space=vmem, size = 0x12000, scoped, tag = 'internal scratch']
  #allocation2 [shape = 'f32[1,1]{1,0:T(1,128)S(1)}', space=vmem, size = 0x200, scoped, tag = 'scoped memory for discriminator_forward.3']
  %s0 = inlined_call_operand.vmem [shape: f32[2,1,100], index: 0, kind: input, shape index: {}]
  %s1 = inlined_call_operand.vmem [shape: f32[1,100], index: 1, kind: input, shape index: {}]
  %s2 = inlined_call_operand.vmem [shape: f32[1,100], index: 2, kind: input, shape index: {}]
  %s3 = inlined_call_operand.<no memory space> [shape: f32[1,1], index: 3, kind: input, shape index: {}]
  %s4 = inlined_call_operand.vmem [shape: f32[1,100], index: 4, kind: input, shape index: {}]
  %s5 = inlined_call_operand.vmem [shape: f32[1,100], index: 5, kind: input, shape index: {}]
  %s6 = inlined_call_operand.hbm [shape: f32[1,1], index: 6, kind: output, shape index: {}]
  %s7 = sld [smem:[#allocation0]]
  $region34: #{discriminator_forward.3} parent=0
    _
  %s9 = ssub.s32 1, %s7
  %s10 = scalar_select 0, %s9, %s7
  %v11 = vstv %s3
  %12 = vst [vmem:[#allocation2] sm:$0x1] %v11
  $region1: #{discriminator_forward.3} parent=0
    #allocation3 [shape = 'u8[512]{0}', space=vmem, size = 0x400, scoped, tag = 'output window, operand 0, single buffered']
    #allocation4 [shape = 's32[1]{0}', space=sflag, size = 0x4, scoped, tag = 'scoped memory for discriminator_forward.3']
    %13 = vsyncpa [#allocation4], 0
    // Predicated region
    $region2: #{discriminator_forward.3} parent=1 // pred_check
      _
    $region3: #{discriminator_forward.3} parent=1 // pred_check_branch
      %15 = sbr.rel (0) target = $region5
    $region4: #{discriminator_forward.3} parent=1 // pred_region
      _
    $region5: #{discriminator_forward.3} parent=1 // pred_fallthru
      _
    // Predicated region
    $region6: #{discriminator_forward.3} parent=1 // pred_check
      _
    $region7: #{discriminator_forward.3} parent=1 // pred_check_branch
      %17 = sbr.rel (0) target = $region9
    $region8: #{discriminator_forward.3} parent=1 // pred_region
      _
    $region9: #{discriminator_forward.3} parent=1 // pred_fallthru
      _
    // Predicated region
    $region10: #{discriminator_forward.3} parent=1 // pred_check
      _
    $region11: #{discriminator_forward.3} parent=1 // pred_check_branch
      %19 = sbr.rel (0) target = $region13
    $region12: #{discriminator_forward.3} parent=1 // pred_region
      _
    $region13: #{discriminator_forward.3} parent=1 // pred_fallthru
      _
    // Predicated region
    $region14: #{discriminator_forward.3} parent=1 // pred_check
      _
    $region15: #{discriminator_forward.3} parent=1 // pred_check_branch
      %21 = sbr.rel (0) target = $region17
    $region16: #{discriminator_forward.3} parent=1 // pred_region
      _
    $region17: #{discriminator_forward.3} parent=1 // pred_fallthru
      _
    // Predicated region
    $region18: #{discriminator_forward.3} parent=1 // pred_check
      _
    $region19: #{discriminator_forward.3} parent=1 // pred_check_branch
      %23 = sbr.rel (0) target = $region21
    $region20: #{discriminator_forward.3} parent=1 // pred_region
      _
    $region21: #{discriminator_forward.3} parent=1 // pred_fallthru
      _
    // Predicated region
    $region22: #{discriminator_forward.3} parent=1 // pred_check
      _
    $region23: #{discriminator_forward.3} parent=1 // pred_check_branch
      %25 = sbr.rel (0) target = $region25
    $region24: #{discriminator_forward.3} parent=1 // pred_region
      _
    $region25: #{discriminator_forward.3} parent=1 // pred_fallthru
      _
    %v26 = vld [vmem:[%s0] sm:$0x1]
    %v27 = vld [vmem:[%s0 + $0x1] sm:$0x1]
    %vm28 = vcmask 811008
    %v29 = vsel %vm28, %v26, 0.0
    %v30 = vsel %vm28, %v27, 0.0
    %v31 = vadd.f32 %v29, %v30
    %v32 = vld [vmem:[%s1] sm:$0x1]
    %v33 = vadd.f32 %v31, %v32
    %vm34 = vcmp.gt.f32.partialorder %v33, 0.0
    %v35 = vmul.f32 %v33, 0.01
    %v36 = vsel %vm34, %v33, %v35
    %v37 = vsel %vm28, %v36, 0.0
    %38 = vadd.xlane.f32.xlu0 %v37
    %v39 = vpop.xlane.xlu0 %38
    %v40 = vrcp.pop 100.0
    %v41 = vmul.f32 %v39, %v40
    %v42 = vsub.f32 %v36, %v41
    %v43 = vmul.f32 %v42, %v42
    %v44 = vsel %vm28, %v43, 0.0
    %45 = vadd.xlane.f32.xlu0 %v44
    %v46 = vpop.xlane.xlu0 %45
    %v47 = vmul.f32 %v46, %v40
    %v48 = vadd.f32 %v47, 1e-05
    %v49 = vrsqrt.pop %v48
    %v50 = vmul.f32 %v42, %v49
    %v51 = vld [vmem:[%s4] sm:$0x1]
    %v52 = vmul.f32 %v50, %v51
    %v53 = vld [vmem:[%s5] sm:$0x1]
    %v54 = vadd.f32 %v52, %v53
    %v55 = vld [vmem:[%s2] sm:$0x1]
    %v56 = vmul.f32 %v54, %v55
    %v57 = vsel %vm28, %v56, 0.0
    %58 = vadd.xlane.f32.xlu0 %v57
    %v59 = vpop.xlane.xlu0 %58
    %v60 = vld [vmem:[#allocation2] sm:$0x1]
    %v61 = vadd.f32 %v59, %v60
    %v62 = vxor.u32 %v61, 2147483648
    %v63 = vmul.f32 %v62, 1.442695
    %v64 = vpow.pop %v63
    %v65 = vadd.f32 %v64, 1.0
    %v66 = vrcp.pop %v65
    %v67 = vmul.f32 1.0, %v66
    %vm68 = vcmask 0
    %69 = vst.msk [vmem:[#allocation3] sm:$0x1] %vm68, %v67
    // Predicated region
    $region26: #{discriminator_forward.3} parent=1 // pred_check
      _
    $region27: #{discriminator_forward.3} parent=1 // pred_check_branch
      %71 = sbr.rel (0) target = $region29
    $region28: #{discriminator_forward.3} parent=1 // pred_region
      %s73 = ssub.s32 16, 16
      %74 = vsyncadd [#allocation4], %s73
      %s76 = sshll.u32 [#allocation3], 4
      %s77 = int_to_ptr.vmem [resolvable:$true] %s76
      %79 = dma.vmem_to_hbm [thread:$0]  %s77, 16, %s6, [#allocation4]
    $region29: #{discriminator_forward.3} parent=1 // pred_fallthru
      _
    // Predicated region
    $region30: #{discriminator_forward.3} parent=1 // pred_check
      _
    $region31: #{discriminator_forward.3} parent=1 // pred_check_branch
      %81 = sbr.rel (0) target = $region33
    $region32: #{discriminator_forward.3} parent=1 // pred_region
      %82 = dma.done [#allocation4], 16
    $region33: #{discriminator_forward.3} parent=1 // pred_fallthru
      _
    %83 = vsyncpa [#allocation4], 1

// kernel: discriminator_forward.2
$region0: #{discriminator_forward.2}
  #allocation0 [shape = 'u32[]', space=smem, size = 0x4, offset = 0x4, fixed_abs, tag = 'smem constant byte address 0x4 - core index']
  #allocation1 [shape = 'u32[144,128]{1,0:T(1,128)}', space=vmem, size = 0x12000, scoped, tag = 'internal scratch']
  #allocation2 [shape = 'f32[1,100]{1,0:T(1,128)}', space=vmem, size = 0x200, scoped, tag = 'scratch operand']
  %s0 = inlined_call_operand.vmem [shape: bf16[1,768], index: 0, kind: input, shape index: {}]
  %s1 = inlined_call_operand.vmem [shape: bf16[768,100], index: 1, kind: input, shape index: {}]
  %s2 = inlined_call_operand.vmem [shape: f32[2,1,100], index: 2, kind: output, shape index: {}]
  %s3 = sld [smem:[#allocation0]]
  $region49: #{discriminator_forward.2} parent=0
    _
  %s5 = ssub.s32 1, %s3
  %s6 = scalar_select 0, %s5, %s3
  loop: start=0, step=1, limit=4
  $region2: #{discriminator_forward.2} parent=0 // loop_pre_header
    _
  $region3: #{discriminator_forward.2} parent=0 // loop_header
    %s8 = sphi 0, %s12
    %p9 = scmp.ge.s32.totalorder %s8, 4
    %s15 = sphi 0, %s27
    %s16 = sphi 0, %s23
    %s17 = sphi 0, %s15
    %s18 = sphi 0, %s16
    %s19 = sphi 0, %s17
    %s20 = sphi 0, %s18
    %s32 = sphi 0, %s34
    %s35 = sphi 0, %s32
    %s36 = sphi 0, %s35
    %s52 = sphi 0, %s36
    %s60 = sphi 0, %s62
    %s63 = sphi 0, %s60
    %s64 = sphi 0, %s63
    %s80 = sphi 0, %s64
    %s86 = sphi 0, %s88
    %s89 = sphi 0, %s86
    %s90 = sphi 0, %s89
    %s106 = sphi 0, %s90
  $region4: #{discriminator_forward.2} parent=0 // loop_header_branch
    %11 = sbr.rel (%p9) target = $region8
  $region5: #{discriminator_forward.2} parent=0 // loop_body
    %s13 = ssub.s32 %s8, 1
    %s14 = ssub.s32 %s8, 2
    %s21 = sadd.s32 1, %s16
    %p22 = scmp.ge.s32.totalorder %s21, 1
    %s23 = scalar_select %p22, 0, %s21
    %s24 = sadd.s32 1, %s15
    %s25 = scalar_select %p22, %s24, %s15
    %p26 = scmp.ge.s32.totalorder %s25, 2
    %s27 = scalar_select %p26, 0, %s25
    %s28 = sadd.s32 %s15, %s16
    %s29 = sadd.s32 %s27, %s23
    %s30 = ssub.s32 %s28, %s29
    %p31 = scmp.eq.s32.totalorder %s30, 0
    %s33 = sadd.s32 %s32, 1
    %s34 = scalar_select %p31, %s32, %s33
    %p37 = pneg %p31
    %p38 = scmp.eq.s32.totalorder %s8, 1
    %p39 = por %p37, %p38
    %p40 = scmp.ne.s32.totalorder %s32, %s35
    %p41 = scmp.eq.s32.totalorder %s8, 0
    %p42 = por %p40, %p41
    %p43 = scmp.ne.s32.totalorder %s32, %s35
    %p44 = scmp.eq.s32.totalorder %s13, 1
    %p45 = por %p43, %p44
    %p46 = scmp.ne.s32.totalorder %s35, %s36
    %p47 = scmp.eq.s32.totalorder %s13, 0
    %p48 = por %p46, %p47
    %p49 = scmp.ne.s32.totalorder %s35, %s36
    %p50 = scmp.eq.s32.totalorder %s14, 1
    %p51 = por %p49, %p50
    %p53 = scmp.ne.s32.totalorder %s36, %s52
    %p54 = scmp.eq.s32.totalorder %s14, 0
    %p55 = por %p53, %p54
    %s56 = sadd.s32 %s15, %s16
    %s57 = sadd.s32 %s27, %s23
    %s58 = ssub.s32 %s56, %s57
    %p59 = scmp.eq.s32.totalorder %s58, 0
    %s61 = sadd.s32 %s60, 1
    %s62 = scalar_select %p59, %s60, %s61
    %p65 = pneg %p59
    %p66 = scmp.eq.s32.totalorder %s8, 1
    %p67 = por %p65, %p66
    %p68 = scmp.ne.s32.totalorder %s60, %s63
    %p69 = scmp.eq.s32.totalorder %s8, 0
    %p70 = por %p68, %p69
    %p71 = scmp.ne.s32.totalorder %s60, %s63
    %p72 = scmp.eq.s32.totalorder %s13, 1
    %p73 = por %p71, %p72
    %p74 = scmp.ne.s32.totalorder %s63, %s64
    %p75 = scmp.eq.s32.totalorder %s13, 0
    %p76 = por %p74, %p75
    %p77 = scmp.ne.s32.totalorder %s63, %s64
    %p78 = scmp.eq.s32.totalorder %s14, 1
    %p79 = por %p77, %p78
    %p81 = scmp.ne.s32.totalorder %s64, %s80
    %p82 = scmp.eq.s32.totalorder %s14, 0
    %p83 = por %p81, %p82
    %s84 = ssub.s32 %s15, %s27
    %p85 = scmp.eq.s32.totalorder %s84, 0
    %s87 = sadd.s32 %s86, 1
    %s88 = scalar_select %p85, %s86, %s87
    %p91 = pneg %p85
    %p92 = scmp.eq.s32.totalorder %s8, 1
    %p93 = por %p91, %p92
    %p94 = scmp.ne.s32.totalorder %s86, %s89
    %p95 = scmp.eq.s32.totalorder %s8, 0
    %p96 = por %p94, %p95
    %p97 = scmp.ne.s32.totalorder %s86, %s89
    %p98 = scmp.eq.s32.totalorder %s13, 1
    %p99 = por %p97, %p98
    %p100 = scmp.ne.s32.totalorder %s89, %s90
    %p101 = scmp.eq.s32.totalorder %s13, 0
    %p102 = por %p100, %p101
    %p103 = scmp.ne.s32.totalorder %s89, %s90
    %p104 = scmp.eq.s32.totalorder %s14, 1
    %p105 = por %p103, %p104
    %p107 = scmp.ne.s32.totalorder %s90, %s106
    %p108 = scmp.eq.s32.totalorder %s14, 0
    %p109 = por %p107, %p108
    %p110 = scmp.le.s32.totalorder 1, %s8
    %p111 = scmp.lt.s32.totalorder %s8, 3
    %p112 = pnand %p110, %p111
    %p113 = pneg %p112
    // Predicated region
    $region9: #{discriminator_forward.2} parent=5 // pred_check
      _
    $region10: #{discriminator_forward.2} parent=5 // pred_check_branch
      %115 = sbr.rel (%p112) target = $region12
    $region11: #{discriminator_forward.2} parent=5 // pred_region
      %s116 = ssub.s32 %s8, 1
    $region12: #{discriminator_forward.2} parent=5 // pred_fallthru
      _
    %p117 = scmp.lt.s32.totalorder %s8, 2
    // Predicated region
    $region13: #{discriminator_forward.2} parent=5 // pred_check
      %p118 = pneg %p117
    $region14: #{discriminator_forward.2} parent=5 // pred_check_branch
      %120 = sbr.rel (%p118) target = $region16
    $region15: #{discriminator_forward.2} parent=5 // pred_region
      // Predicated region
      $region17: #{discriminator_forward.2} parent=15 // pred_check
        %p121 = pneg %p42
      $region18: #{discriminator_forward.2} parent=15 // pred_check_branch
        %123 = sbr.rel (%p121) target = $region20
      $region19: #{discriminator_forward.2} parent=15 // pred_region
        %s124 = sadd.s32 %s15, %s16
        %s125 = smul.u32 3, %s124
        %p126 = scmp.lt.s32.totalorder %s125, 5
        %s127 = scalar_select %p126, %s125, 5
        %s128 = scalar_lea.vmem %s0, %s127
        %s129 = sadd.s32 %s15, %s16
        %s130 = smul.u32 3, %s129
      $region20: #{discriminator_forward.2} parent=15 // pred_fallthru
        _
      // Predicated region
      $region21: #{discriminator_forward.2} parent=15 // pred_check
        %p131 = pneg %p70
      $region22: #{discriminator_forward.2} parent=15 // pred_check_branch
        %133 = sbr.rel (%p131) target = $region24
      $region23: #{discriminator_forward.2} parent=15 // pred_region
        %s134 = sadd.s32 %s15, %s16
        %s135 = smul.u32 48, %s134
        %p136 = scmp.lt.s32.totalorder %s135, 95
        %s137 = scalar_select %p136, %s135, 95
        %s138 = smul.addr %s137, 4
        %s139 = scalar_lea.vmem %s1, %s138
        %s140 = sadd.s32 %s15, %s16
        %s141 = smul.u32 48, %s140
      $region24: #{discriminator_forward.2} parent=15 // pred_fallthru
        _
    $region16: #{discriminator_forward.2} parent=5 // pred_fallthru
      _
    %p142 = scmp.le.s32.totalorder 1, %s8
    %p143 = scmp.lt.s32.totalorder %s8, 3
    %p144 = pnand %p142, %p143
    %p145 = pneg %p144
    // Predicated region
    $region25: #{discriminator_forward.2} parent=5 // pred_check
      _
    $region26: #{discriminator_forward.2} parent=5 // pred_check_branch
      %147 = sbr.rel (%p144) target = $region28
    $region27: #{discriminator_forward.2} parent=5 // pred_region
      %s148 = ssub.s32 %s8, 1
      %s149 = sadd.s32 %s17, %s18
      %s150 = smul.u32 3, %s149
      %p151 = scmp.lt.s32.totalorder %s150, 5
      %s152 = scalar_select %p151, %s150, 5
      %s153 = scalar_lea.vmem %s0, %s152
      %p154 = pneg %p48
      %p155 = pneg %p45
      %s156 = sadd.s32 %s17, %s18
      %s157 = smul.u32 48, %s156
      %p158 = scmp.lt.s32.totalorder %s157, 95
      %s159 = scalar_select %p158, %s157, 95
      %s160 = smul.addr %s159, 4
      %s161 = scalar_lea.vmem %s1, %s160
      %p162 = pneg %p76
      %p163 = pneg %p73
      %p164 = pneg %p102
      %p165 = pneg %p99
      %p166 = scmp.lt.s32.totalorder %s17, 1
      %s167 = scalar_select %p166, %s17, 1
      %s168 = scalar_lea.vmem %s2, %s167
      %s169 = sadd.s32 %s17, %s18
      %s170 = smul.u32 3, %s169
      %p171 = scmp.lt.s32.totalorder %s170, 5
      %s172 = scalar_select %p171, %s170, 5
      %s173 = scalar_lea.vmem %s0, %s172
      %s174 = sadd.s32 %s17, %s18
      %s175 = smul.u32 3, %s174
      %s176 = sadd.s32 %s17, %s18
      %s177 = smul.u32 48, %s176
      %p178 = scmp.lt.s32.totalorder %s177, 95
      %s179 = scalar_select %p178, %s177, 95
      %s180 = smul.addr %s179, 4
      %s181 = scalar_lea.vmem %s1, %s180
      %s182 = sadd.s32 %s17, %s18
      %s183 = smul.u32 48, %s182
      %p184 = scmp.lt.s32.totalorder %s17, 1
      %s185 = scalar_select %p184, %s17, 1
      %s186 = scalar_lea.vmem %s2, %s185
      %p188 = scmp.eq.s32.totalorder %s18, 0
      // Predicated region
      $region29: #{discriminator_forward.2} parent=27 // pred_check
        %p189 = pneg %p188
      $region30: #{discriminator_forward.2} parent=27 // pred_check_branch
        %191 = sbr.rel (%p189) target = $region32
      $region31: #{discriminator_forward.2} parent=27 // pred_region
        %vm192 = vcmask 811008
        %193 = vst.msk [vmem:[#allocation2] sm:$0x1] %vm192, 0.0
      $region32: #{discriminator_forward.2} parent=27 // pred_fallthru
        _
      %v194 = vld [vmem:[#allocation2] sm:$0x1]
      %v195 = vld [vmem:[%s173] sm:$0x7]
      %v196 = vld [vmem:[%s181] sm:$0xf]
      %v197 = vld [vmem:[%s181 + $0x4] sm:$0xf]
      %v198 = vld [vmem:[%s181 + $0x8] sm:$0xf]
      %v199 = vld [vmem:[%s181 + $0xc] sm:$0xf]
      %v200 = vld [vmem:[%s181 + $0x10] sm:$0xf]
      %v201 = vld [vmem:[%s181 + $0x14] sm:$0xf]
      %v202 = vld [vmem:[%s181 + $0x18] sm:$0xf]
      %v203 = vld [vmem:[%s181 + $0x1c] sm:$0xf]
      %v204 = vld [vmem:[%s181 + $0x20] sm:$0xf]
      %v205 = vld [vmem:[%s181 + $0x24] sm:$0xf]
      %v206 = vld [vmem:[%s181 + $0x28] sm:$0xf]
      %v207 = vld [vmem:[%s181 + $0x2c] sm:$0xf]
      %v208 = vld [vmem:[%s181 + $0x30] sm:$0xf]
      %v209 = vld [vmem:[%s181 + $0x34] sm:$0xf]
      %v210 = vld [vmem:[%s181 + $0x38] sm:$0xf]
      %v211 = vld [vmem:[%s181 + $0x3c] sm:$0xf]
      %v212 = vld [vmem:[%s181 + $0x40] sm:$0xf]
      %v213 = vld [vmem:[%s181 + $0x44] sm:$0xf]
      %v214 = vld [vmem:[%s181 + $0x48] sm:$0xf]
      %v215 = vld [vmem:[%s181 + $0x4c] sm:$0xf]
      %v216 = vld [vmem:[%s181 + $0x50] sm:$0xf]
      %v217 = vld [vmem:[%s181 + $0x54] sm:$0xf]
      %v218 = vld [vmem:[%s181 + $0x58] sm:$0xf]
      %v219 = vld [vmem:[%s181 + $0x5c] sm:$0xf]
      %v220 = vld [vmem:[%s181 + $0x60] sm:$0xf]
      %v221 = vld [vmem:[%s181 + $0x64] sm:$0xf]
      %v222 = vld [vmem:[%s181 + $0x68] sm:$0xf]
      %v223 = vld [vmem:[%s181 + $0x6c] sm:$0xf]
      %v224 = vld [vmem:[%s181 + $0x70] sm:$0xf]
      %v225 = vld [vmem:[%s181 + $0x74] sm:$0xf]
      %v226 = vld [vmem:[%s181 + $0x78] sm:$0xf]
      %v227 = vld [vmem:[%s181 + $0x7c] sm:$0xf]
      %v228 = vld [vmem:[%s181 + $0x80] sm:$0xf]
      %v229 = vld [vmem:[%s181 + $0x84] sm:$0xf]
      %v230 = vld [vmem:[%s181 + $0x88] sm:$0xf]
      %v231 = vld [vmem:[%s181 + $0x8c] sm:$0xf]
      %v232 = vld [vmem:[%s181 + $0x90] sm:$0xf]
      %v233 = vld [vmem:[%s181 + $0x94] sm:$0xf]
      %v234 = vld [vmem:[%s181 + $0x98] sm:$0xf]
      %v235 = vld [vmem:[%s181 + $0x9c] sm:$0xf]
      %v236 = vld [vmem:[%s181 + $0xa0] sm:$0xf]
      %v237 = vld [vmem:[%s181 + $0xa4] sm:$0xf]
      %v238 = vld [vmem:[%s181 + $0xa8] sm:$0xf]
      %v239 = vld [vmem:[%s181 + $0xac] sm:$0xf]
      %v240 = vld [vmem:[%s181 + $0xb0] sm:$0xf]
      %v241 = vld [vmem:[%s181 + $0xb4] sm:$0xf]
      %v242 = vld [vmem:[%s181 + $0xb8] sm:$0xf]
      %v243 = vld [vmem:[%s181 + $0xbc] sm:$0xf]
      %v246 = vunpack.c.l.s4 1966171168
      %v247 = vunpack.c.0.s8 %v246
      %v248 = vlaneseq
      %v249 = vshrl.u32 %v248, 7
      %v250 = vsub.s32 %v247, %v249
      %v251 = vrot.slane %v195, %v250
      %v252 = vcombine.high %v251, %v251
      %v254 = vunpack.c.l.s4 1966171168
      %v255 = vunpack.c.0.s8 %v254
      %v256 = vlaneseq
      %v257 = vshrl.u32 %v256, 7
      %v258 = vsub.s32 %v255, %v257
      %v259 = vrot.slane %v251, %v258
      %v261 = vunpack.c.l.s4 1966171168
      %v262 = vunpack.c.0.s8 %v261
      %v263 = vlaneseq
      %v264 = vshrl.u32 %v263, 7
      %v265 = vsub.s32 %v262, %v264
      %v266 = vrot.slane %v252, %v265
      %v267 = vcombine.high %v259, %v259
      %v319 = vunpack.c.l.b16 %v196
      %v320 = vunpack.c.l.b16 %v197
      %v321 = vunpack.c.l.b16 %v198
      %v322 = vunpack.c.l.b16 %v199
      %v323 = vunpack.c.l.b16 %v200
      %v324 = vunpack.c.l.b16 %v201
      %v325 = vunpack.c.l.b16 %v202
      %v326 = vunpack.c.l.b16 %v203
      %v327 = vunpack.c.l.b16 %v204
      %v328 = vunpack.c.l.b16 %v205
      %v329 = vunpack.c.l.b16 %v206
      %v330 = vunpack.c.l.b16 %v207
      %v331 = vunpack.c.l.b16 %v208
      %v332 = vunpack.c.l.b16 %v209
      %v333 = vunpack.c.l.b16 %v210
      %v334 = vunpack.c.l.b16 %v211
      %v335 = vunpack.c.l.b16 %v212
      %v336 = vunpack.c.l.b16 %v213
      %v337 = vunpack.c.l.b16 %v214
      %v338 = vunpack.c.l.b16 %v215
      %v339 = vunpack.c.l.b16 %v216
      %v340 = vunpack.c.l.b16 %v217
      %v341 = vunpack.c.l.b16 %v218
      %v342 = vunpack.c.l.b16 %v219
      %v343 = vunpack.c.l.b16 %v220
      %v344 = vunpack.c.l.b16 %v221
      %v345 = vunpack.c.l.b16 %v222
      %v346 = vunpack.c.l.b16 %v223
      %v347 = vunpack.c.l.b16 %v224
      %v348 = vunpack.c.l.b16 %v225
      %v349 = vunpack.c.l.b16 %v226
      %v350 = vunpack.c.l.b16 %v227
      %v351 = vunpack.c.l.b16 %v228
      %v352 = vunpack.c.l.b16 %v229
      %v353 = vunpack.c.l.b16 %v230
      %v354 = vunpack.c.l.b16 %v231
      %v355 = vunpack.c.l.b16 %v232
      %v356 = vunpack.c.l.b16 %v233
      %v357 = vunpack.c.l.b16 %v234
      %v358 = vunpack.c.l.b16 %v235
      %v359 = vunpack.c.l.b16 %v236
      %v360 = vunpack.c.l.b16 %v237
      %v361 = vunpack.c.l.b16 %v238
      %v362 = vunpack.c.l.b16 %v239
      %v363 = vunpack.c.l.b16 %v240
      %v364 = vunpack.c.l.b16 %v241
      %v365 = vunpack.c.l.b16 %v242
      %v366 = vunpack.c.l.b16 %v243
      %v367 = vpack.c.b16 %v320, %v319
      %v368 = vpack.c.b16 %v322, %v321
      %v369 = vpack.c.b16 %v324, %v323
      %v370 = vpack.c.b16 %v326, %v325
      %v371 = vpack.c.b16 %v328, %v327
      %v372 = vpack.c.b16 %v330, %v329
      %v373 = vpack.c.b16 %v332, %v331
      %v374 = vpack.c.b16 %v334, %v333
      %v375 = vpack.c.b16 %v336, %v335
      %v376 = vpack.c.b16 %v338, %v337
      %v377 = vpack.c.b16 %v340, %v339
      %v378 = vpack.c.b16 %v342, %v341
      %v379 = vpack.c.b16 %v344, %v343
      %v380 = vpack.c.b16 %v346, %v345
      %v381 = vpack.c.b16 %v348, %v347
      %v382 = vpack.c.b16 %v350, %v349
      %v383 = vpack.c.b16 %v352, %v351
      %v384 = vpack.c.b16 %v354, %v353
      %v385 = vpack.c.b16 %v356, %v355
      %v386 = vpack.c.b16 %v358, %v357
      %v387 = vpack.c.b16 %v360, %v359
      %v388 = vpack.c.b16 %v362, %v361
      %v389 = vpack.c.b16 %v364, %v363
      %v390 = vpack.c.b16 %v366, %v365
      %415 = vmatprep.subr.bf16.mxu0 0
      %416 = vmatpush1.bf16.msra.mxu0 %v374
      %417 = vmatprep.subr.bf16.mxu0 0
      %418 = vmatpush1.bf16.msra.mxu0 %v373
      %419 = vmatprep.subr.bf16.mxu0 0
      %420 = vmatpush1.bf16.msra.mxu0 %v372
      %421 = vmatprep.subr.bf16.mxu0 0
      %422 = vmatpush1.bf16.msra.mxu0 %v371
      %423 = vmatprep.subr.bf16.mxu0 0
      %424 = vmatpush1.bf16.msra.mxu0 %v370
      %425 = vmatprep.subr.bf16.mxu0 0
      %426 = vmatpush1.bf16.msra.mxu0 %v369
      %427 = vmatprep.subr.bf16.mxu0 0
      %428 = vmatpush1.bf16.msra.mxu0 %v368
      %429 = vmatprep.subr.bf16.mxu0 0
      %430 = vmatpush1.bf16.msra.mxu0 %v367
      %431 = vmatprep.subr.bf16.mxu0 0
      %432 = vmatpush2.bf16.msra.mxu0 %v382
      %433 = vmatprep.subr.bf16.mxu0 0
      %434 = vmatpush2.bf16.msra.mxu0 %v381
      %435 = vmatprep.subr.bf16.mxu0 0
      %436 = vmatpush2.bf16.msra.mxu0 %v380
      %437 = vmatprep.subr.bf16.mxu0 0
      %438 = vmatpush2.bf16.msra.mxu0 %v379
      %439 = vmatprep.subr.bf16.mxu0 0
      %440 = vmatpush2.bf16.msra.mxu0 %v378
      %441 = vmatprep.subr.bf16.mxu0 0
      %442 = vmatpush2.bf16.msra.mxu0 %v377
      %443 = vmatprep.subr.bf16.mxu0 0
      %444 = vmatpush2.bf16.msra.mxu0 %v376
      %445 = vmatprep.subr.bf16.mxu0 0
      %446 = vmatpush2.bf16.msra.mxu0 %v375
      %447 = vmatprep.mubr.bf16.mxu0 %v266
      %448 = vmatmul.mubr.bf16.gmra.mxu0 %v259
      %v449 = vpop.f32.mrf.mxu0
      %v450 = vadd.f32 0.0, %v449
      %v451 = vpop.f32.mrf.mxu0
      %v452 = vpop.f32.mrf.mxu0
      %v453 = vpop.f32.mrf.mxu0
      %454 = vdwg.mxu0
      %455 = vmatprep.subr.bf16.mxu0 0
      %456 = vmatpush1.bf16.msra.mxu0 %v390
      %457 = vmatprep.subr.bf16.mxu0 0
      %458 = vmatpush1.bf16.msra.mxu0 %v389
      %459 = vmatprep.subr.bf16.mxu0 0
      %460 = vmatpush1.bf16.msra.mxu0 %v388
      %461 = vmatprep.subr.bf16.mxu0 0
      %462 = vmatpush1.bf16.msra.mxu0 %v387
      %463 = vmatprep.subr.bf16.mxu0 0
      %464 = vmatpush1.bf16.msra.mxu0 %v386
      %465 = vmatprep.subr.bf16.mxu0 0
      %466 = vmatpush1.bf16.msra.mxu0 %v385
      %467 = vmatprep.subr.bf16.mxu0 0
      %468 = vmatpush1.bf16.msra.mxu0 %v384
      %469 = vmatprep.subr.bf16.mxu0 0
      %470 = vmatpush1.bf16.msra.mxu0 %v383
      %471 = vmatprep.subr.bf16.mxu0 0
      %472 = vmatpush2.bf16.msra.mxu0 0
      %473 = vmatprep.subr.bf16.mxu0 0
      %474 = vmatpush2.bf16.msra.mxu0 0
      %475 = vmatprep.subr.bf16.mxu0 0
      %476 = vmatpush2.bf16.msra.mxu0 0
      %477 = vmatprep.subr.bf16.mxu0 0
      %478 = vmatpush2.bf16.msra.mxu0 0
      %479 = vmatprep.subr.bf16.mxu0 0
      %480 = vmatpush2.bf16.msra.mxu0 0
      %481 = vmatprep.subr.bf16.mxu0 0
      %482 = vmatpush2.bf16.msra.mxu0 0
      %483 = vmatprep.subr.bf16.mxu0 0
      %484 = vmatpush2.bf16.msra.mxu0 0
      %485 = vmatprep.subr.bf16.mxu0 0
      %486 = vmatpush2.bf16.msra.mxu0 0
      %487 = vmatprep.mubr.bf16.mxu0 0
      %488 = vmatmul.mubr.bf16.gmra.mxu0 %v267
      %v489 = vpop.f32.mrf.mxu0
      %v490 = vadd.f32 %v450, %v489
      %v491 = vpop.f32.mrf.mxu0
      %v492 = vpop.f32.mrf.mxu0
      %v493 = vpop.f32.mrf.mxu0
      %494 = vdwg.mxu0
      %v495 = vadd.f32 %v194, %v490
      %vm496 = vcmask 811008
      %497 = vst.msk [vmem:[#allocation2] sm:$0x1] %vm496, %v495
      // Predicated region
      $region33: #{discriminator_forward.2} parent=27 // pred_check
        %p498 = pneg %p188
      $region34: #{discriminator_forward.2} parent=27 // pred_check_branch
        %500 = sbr.rel (%p498) target = $region36
      $region35: #{discriminator_forward.2} parent=27 // pred_region
        %v501 = vld [vmem:[#allocation2] sm:$0x1]
        %502 = vst.msk [vmem:[%s186] sm:$0x1] %vm496, %v501
      $region36: #{discriminator_forward.2} parent=27 // pred_fallthru
        _
      %p503 = scmp.lt.s32.totalorder %s17, 1
      %s504 = scalar_select %p503, %s17, 1
      %s505 = scalar_lea.vmem %s2, %s504
      // Predicated region
      $region37: #{discriminator_forward.2} parent=27 // pred_check
        %p506 = pneg %p99
      $region38: #{discriminator_forward.2} parent=27 // pred_check_branch
        %508 = sbr.rel (%p506) target = $region40
      $region39: #{discriminator_forward.2} parent=27 // pred_region
        _
      $region40: #{discriminator_forward.2} parent=27 // pred_fallthru
        _
    $region28: #{discriminator_forward.2} parent=5 // pred_fallthru
      _
    %p509 = scmp.le.s32.totalorder 2, %s8
    // Predicated region
    $region41: #{discriminator_forward.2} parent=5 // pred_check
      %p510 = pneg %p509
    $region42: #{discriminator_forward.2} parent=5 // pred_check_branch
      %512 = sbr.rel (%p510) target = $region44
    $region43: #{discriminator_forward.2} parent=5 // pred_region
      %s513 = ssub.s32 %s8, 2
      // Predicated region
      $region45: #{discriminator_forward.2} parent=43 // pred_check
        %p514 = pneg %p105
      $region46: #{discriminator_forward.2} parent=43 // pred_check_branch
        %516 = sbr.rel (%p514) target = $region48
      $region47: #{discriminator_forward.2} parent=43 // pred_region
        %p517 = scmp.lt.s32.totalorder %s19, 1
        %s518 = scalar_select %p517, %s19, 1
        %s519 = scalar_lea.vmem %s2, %s518
      $region48: #{discriminator_forward.2} parent=43 // pred_fallthru
        _
    $region44: #{discriminator_forward.2} parent=5 // pred_fallthru
      _
  $region6: #{discriminator_forward.2} parent=0 // loop_footer
    %s12 = sadd.s32 1, %s8
  $region7: #{discriminator_forward.2} parent=0 // loop_footer_branch
    %7 = sbr.rel target = $region3
  $region8: #{discriminator_forward.2} parent=0 // loop_exit
    _

</llo_original>
